<compile_context>
chip_gen: v7x
topology: tpu7x:2x2x1
jax: 0.10.0
libtpu: 0.0.40
codegen_flags: <defaults>
</compile_context>

<pallas_src>
import jax
import jax.numpy as jnp
from jax.experimental import pallas as pl
from jax.experimental.pallas import tpu as pltpu


# ----------------------------------------------------------------------------
# Fused kernel: conv1 + ReLU (VPU) -> conv2 + sigmoid (MXU), one output tile.
# ----------------------------------------------------------------------------
def _fused_encoder_kernel(xw_ref, w1_ref, b1_ref, w2_ref, b2_ref, o_ref):
    """Shapes of the refs (T = L2 tile width, positions on lanes):
      xw_ref : (1, 9, T)   xw[o, t] = x[4*t + o]              (input phases)
      w1_ref : (32, 5)     conv1 weight  (Cout1, K1)
      b1_ref : (32, 1)     conv1 bias
      w2_ref : (64, 96)    conv2 weight, [co, 32*j + ci] = W2[co, ci, j]
      b2_ref : (64, 1)     conv2 bias
      o_ref  : (1, 64, T)  output block, already in NCL layout
    """
    xw = xw_ref[0]                                    # (9, T)
    w1 = w1_ref[...]                                  # (32, 5)
    b1 = b1_ref[...]                                  # (32, 1)

    # conv1 + ReLU for the three conv2 taps (h1 rows 2t, 2t+1, 2t+2 per output
    # position t).  Pure VPU broadcast-FMAs -- keeps the tiny K=5 contraction
    # off the MXU and the intermediate entirely on-chip.
    taps = []
    for j in range(3):
        acc = w1[:, 0:1] * xw[2 * j : 2 * j + 1, :]               # (32, T)
        for k in range(1, 5):
            acc = acc + w1[:, k : k + 1] * xw[2 * j + k : 2 * j + k + 1, :]
        taps.append(jnp.maximum(acc + b1, 0.0))
    a = jnp.concatenate(taps, axis=0)                             # (96, T)

    # conv2 as a single K=96 MXU matmul with f32 accumulation, then sigmoid.
    h2 = jnp.dot(w2_ref[...], a, preferred_element_type=jnp.float32)  # (64, T)
    o_ref[0, :, :] = jax.nn.sigmoid(h2 + b2_ref[...]).astype(o_ref.dtype)


# ----------------------------------------------------------------------------
# Wrapper: layout prep (static strided slices only) + pallas_call
# ----------------------------------------------------------------------------
def encoder_forward(x, params):
    """x: (N, 1, L) float32  ->  (N, 64, L2) float32 (PyTorch NCL layout)."""
    W1, b1, W2, b2 = params["W1"], params["b1"], params["W2"], params["b2"]
    N, Cin, L = x.shape
    assert Cin == 1
    L1 = (L - 5) // 2 + 1
    L2 = (L1 - 3) // 2 + 1
    assert L2 >= 1, "input too short for the two strided convolutions"

    # Phase split of the 1-channel input: xw[n, o, t] = x[n, 0, 4*t + o].
    # Nine static strided slices (no XLA gather, no activation transposes).
    x2d = x[:, 0, :]                                              # (N, L)
    cols = [x2d[:, o : o + 4 * (L2 - 1) + 1 : 4] for o in range(9)]
    xw = jnp.stack(cols, axis=1)                                  # (N, 9, L2)

    # Tiny trace-time weight repacks.
    w1m = W1.reshape(32, 5)                                       # (Cout1, K1)
    b1c = b1.reshape(32, 1)
    w2m = jnp.transpose(W2, (0, 2, 1)).reshape(64, 96)            # [co, 32*j+ci]
    b2c = b2.reshape(64, 1)

    # L2 tile width: full axis if small, otherwise a lane-dense multiple of 128.
    TILE_T = L2 if L2 <= 1024 else 1024
    n_t = pl.cdiv(L2, TILE_T)

    cost = pl.CostEstimate(
        flops=int(N * L2 * (2 * 64 * 96 + 3 * 2 * 5 * 32)),
        transcendentals=int(N * L2 * 64),
        bytes_accessed=int(
            4 * (N * 9 * L2 + N * 64 * L2 + 32 * 5 + 32 + 64 * 96 + 64)),
    )

    return pl.pallas_call(
        _fused_encoder_kernel,
        out_shape=jax.ShapeDtypeStruct((N, 64, L2), jnp.float32),
        grid=(N, n_t),
        in_specs=[
            pl.BlockSpec((1, 9, TILE_T), lambda n, t: (n, 0, t)),
            pl.BlockSpec((32, 5), lambda n, t: (0, 0)),
            pl.BlockSpec((32, 1), lambda n, t: (0, 0)),
            pl.BlockSpec((64, 96), lambda n, t: (0, 0)),
            pl.BlockSpec((64, 1), lambda n, t: (0, 0)),
        ],
        out_specs=pl.BlockSpec((1, 64, TILE_T), lambda n, t: (n, 0, t)),
        compiler_params=pltpu.CompilerParams(
            dimension_semantics=("parallel", "parallel")),
        cost_estimate=cost,
    )(xw, w1m, b1c, w2m, b2c)


# ----------------------------------------------------------------------------
# Deterministic parameter init (PyTorch-style uniform(-1/sqrt(fan_in), ...))
# ----------------------------------------------------------------------------
def init_params(key):
    k1, k2, k3, k4 = jax.random.split(key, 4)
    bound1 = 1.0 / jnp.sqrt(1.0 * 5)
    bound2 = 1.0 / jnp.sqrt(32.0 * 3)
    return {
        "W1": jax.random.uniform(k1, (32, 1, 5), jnp.float32, -bound1, bound1),
        "b1": jax.random.uniform(k2, (32,), jnp.float32, -bound1, bound1),
        "W2": jax.random.uniform(k3, (64, 32, 3), jnp.float32, -bound2, bound2),
        "b2": jax.random.uniform(k4, (64,), jnp.float32, -bound2, bound2),
    }


# ----------------------------------------------------------------------------
# Pure-JAX reference (lax.conv) for correctness checking
# ----------------------------------------------------------------------------
def reference_forward(x, params):
    dn = jax.lax.conv_dimension_numbers(x.shape, params["W1"].shape,
                                        ("NCH", "OIH", "NCH"))
    h = jax.lax.conv_general_dilated(x, params["W1"], (2,), "VALID",
                                     dimension_numbers=dn,
                                     precision=jax.lax.Precision.HIGHEST)
    h = jax.nn.relu(h + params["b1"][None, :, None])
    dn2 = jax.lax.conv_dimension_numbers(h.shape, params["W2"].shape,
                                         ("NCH", "OIH", "NCH"))
    h = jax.lax.conv_general_dilated(h, params["W2"], (2,), "VALID",
                                     dimension_numbers=dn2,
                                     precision=jax.lax.Precision.HIGHEST)
    return jax.nn.sigmoid(h + params["b2"][None, :, None])


if __name__ == "__main__":
    key = jax.random.PRNGKey(0)
    k_param, k_x = jax.random.split(key)
    params = init_params(k_param)

    # Small input consistent with Conv1d(in_channels=1): (batch=2, C=1, L=64)
    x = jax.random.normal(k_x, (2, 1, 64), dtype=jnp.float32)

    fwd = jax.jit(encoder_forward)
    out = jax.block_until_ready(fwd(x, params))

    ref = jax.block_until_ready(reference_forward(x, params))
    assert out.shape == ref.shape == (2, 64, 14), (out.shape, ref.shape)
    max_err = float(jnp.max(jnp.abs(out - ref)))
    assert jnp.allclose(out, ref, atol=2e-5, rtol=1e-4), f"max_err={max_err}"

    # TODO(synk): conv3 (64->128, k=3, s=2) exists in __init__ but is unused in
    # forward(), so it is intentionally not implemented.
    print("KERNEL_OK")
</pallas_src>

<mosaic_0001>
module attributes {stable_mosaic.version = 11 : i64} {
  func.func @_fused_encoder_kernel(%arg0: i32, %arg1: i32, %arg2: memref<1x9x14xf32, #tpu.memory_space<vmem>>, %arg3: memref<32x5xf32, #tpu.memory_space<vmem>>, %arg4: memref<32x1xf32, #tpu.memory_space<vmem>>, %arg5: memref<64x96xf32, #tpu.memory_space<vmem>>, %arg6: memref<64x1xf32, #tpu.memory_space<vmem>>, %arg7: memref<1x64x14xf32, #tpu.memory_space<vmem>>) attributes {dimension_semantics = [#tpu.dimension_semantics<parallel>, #tpu.dimension_semantics<parallel>], iteration_bounds = array<i64: 2, 1>, scalar_prefetch = 0 : i64, scratch_operands = 0 : i64, tpu.core_type = #tpu.core_type<tc>, window_params = [{transform_indices = @transform_0, window_bounds = array<i64: 1, 9, 14>}, {pipeline_mode = #tpu.pipeline_mode<synchronous>, transform_indices = @transform_1, window_bounds = array<i64: 32, 5>}, {pipeline_mode = #tpu.pipeline_mode<synchronous>, transform_indices = @transform_2, window_bounds = array<i64: 32, 1>}, {pipeline_mode = #tpu.pipeline_mode<synchronous>, transform_indices = @transform_3, window_bounds = array<i64: 64, 96>}, {pipeline_mode = #tpu.pipeline_mode<synchronous>, transform_indices = @transform_4, window_bounds = array<i64: 64, 1>}, {transform_indices = @transform_5, window_bounds = array<i64: 1, 64, 14>}]} {
    %c0 = arith.constant 0 : index
    %c0_0 = arith.constant 0 : index
    %c0_1 = arith.constant 0 : index
    %0 = vector.load %arg2[%c0, %c0_0, %c0_1] : memref<1x9x14xf32, #tpu.memory_space<vmem>>, vector<1x9x14xf32>
    %1 = vector.shape_cast %0 : vector<1x9x14xf32> to vector<9x14xf32>
    %c0_2 = arith.constant 0 : index
    %c0_3 = arith.constant 0 : index
    %2 = vector.load %arg3[%c0_2, %c0_3] : memref<32x5xf32, #tpu.memory_space<vmem>>, vector<32x5xf32>
    %c0_4 = arith.constant 0 : index
    %c0_5 = arith.constant 0 : index
    %3 = vector.load %arg4[%c0_4, %c0_5] : memref<32x1xf32, #tpu.memory_space<vmem>>, vector<32x1xf32>
    %4 = vector.extract_strided_slice %2 {offsets = [0, 0], sizes = [32, 1], strides = [1, 1]} : vector<32x5xf32> to vector<32x1xf32>
    %5 = vector.extract_strided_slice %1 {offsets = [0, 0], sizes = [1, 14], strides = [1, 1]} : vector<9x14xf32> to vector<1x14xf32>
    %6 = vector.broadcast %4 : vector<32x1xf32> to vector<32x14xf32>
    %7 = vector.broadcast %5 : vector<1x14xf32> to vector<32x14xf32>
    %8 = arith.mulf %6, %7 : vector<32x14xf32>
    %9 = vector.extract_strided_slice %2 {offsets = [0, 1], sizes = [32, 1], strides = [1, 1]} : vector<32x5xf32> to vector<32x1xf32>
    %10 = vector.extract_strided_slice %1 {offsets = [1, 0], sizes = [1, 14], strides = [1, 1]} : vector<9x14xf32> to vector<1x14xf32>
    %11 = vector.broadcast %9 : vector<32x1xf32> to vector<32x14xf32>
    %12 = vector.broadcast %10 : vector<1x14xf32> to vector<32x14xf32>
    %13 = arith.mulf %11, %12 : vector<32x14xf32>
    %14 = arith.addf %8, %13 : vector<32x14xf32>
    %15 = vector.extract_strided_slice %2 {offsets = [0, 2], sizes = [32, 1], strides = [1, 1]} : vector<32x5xf32> to vector<32x1xf32>
    %16 = vector.extract_strided_slice %1 {offsets = [2, 0], sizes = [1, 14], strides = [1, 1]} : vector<9x14xf32> to vector<1x14xf32>
    %17 = vector.broadcast %15 : vector<32x1xf32> to vector<32x14xf32>
    %18 = vector.broadcast %16 : vector<1x14xf32> to vector<32x14xf32>
    %19 = arith.mulf %17, %18 : vector<32x14xf32>
    %20 = arith.addf %14, %19 : vector<32x14xf32>
    %21 = vector.extract_strided_slice %2 {offsets = [0, 3], sizes = [32, 1], strides = [1, 1]} : vector<32x5xf32> to vector<32x1xf32>
    %22 = vector.extract_strided_slice %1 {offsets = [3, 0], sizes = [1, 14], strides = [1, 1]} : vector<9x14xf32> to vector<1x14xf32>
    %23 = vector.broadcast %21 : vector<32x1xf32> to vector<32x14xf32>
    %24 = vector.broadcast %22 : vector<1x14xf32> to vector<32x14xf32>
    %25 = arith.mulf %23, %24 : vector<32x14xf32>
    %26 = arith.addf %20, %25 : vector<32x14xf32>
    %27 = vector.extract_strided_slice %2 {offsets = [0, 4], sizes = [32, 1], strides = [1, 1]} : vector<32x5xf32> to vector<32x1xf32>
    %28 = vector.extract_strided_slice %1 {offsets = [4, 0], sizes = [1, 14], strides = [1, 1]} : vector<9x14xf32> to vector<1x14xf32>
    %29 = vector.broadcast %27 : vector<32x1xf32> to vector<32x14xf32>
    %30 = vector.broadcast %28 : vector<1x14xf32> to vector<32x14xf32>
    %31 = arith.mulf %29, %30 : vector<32x14xf32>
    %32 = arith.addf %26, %31 : vector<32x14xf32>
    %33 = vector.broadcast %3 : vector<32x1xf32> to vector<32x14xf32>
    %34 = arith.addf %32, %33 : vector<32x14xf32>
    %cst = arith.constant 0.000000e+00 : f32
    %35 = vector.broadcast %cst : f32 to vector<32x14xf32>
    %36 = arith.maximumf %34, %35 : vector<32x14xf32>
    %37 = vector.extract_strided_slice %2 {offsets = [0, 0], sizes = [32, 1], strides = [1, 1]} : vector<32x5xf32> to vector<32x1xf32>
    %38 = vector.extract_strided_slice %1 {offsets = [2, 0], sizes = [1, 14], strides = [1, 1]} : vector<9x14xf32> to vector<1x14xf32>
    %39 = vector.broadcast %37 : vector<32x1xf32> to vector<32x14xf32>
    %40 = vector.broadcast %38 : vector<1x14xf32> to vector<32x14xf32>
    %41 = arith.mulf %39, %40 : vector<32x14xf32>
    %42 = vector.extract_strided_slice %2 {offsets = [0, 1], sizes = [32, 1], strides = [1, 1]} : vector<32x5xf32> to vector<32x1xf32>
    %43 = vector.extract_strided_slice %1 {offsets = [3, 0], sizes = [1, 14], strides = [1, 1]} : vector<9x14xf32> to vector<1x14xf32>
    %44 = vector.broadcast %42 : vector<32x1xf32> to vector<32x14xf32>
    %45 = vector.broadcast %43 : vector<1x14xf32> to vector<32x14xf32>
    %46 = arith.mulf %44, %45 : vector<32x14xf32>
    %47 = arith.addf %41, %46 : vector<32x14xf32>
    %48 = vector.extract_strided_slice %2 {offsets = [0, 2], sizes = [32, 1], strides = [1, 1]} : vector<32x5xf32> to vector<32x1xf32>
    %49 = vector.extract_strided_slice %1 {offsets = [4, 0], sizes = [1, 14], strides = [1, 1]} : vector<9x14xf32> to vector<1x14xf32>
    %50 = vector.broadcast %48 : vector<32x1xf32> to vector<32x14xf32>
    %51 = vector.broadcast %49 : vector<1x14xf32> to vector<32x14xf32>
    %52 = arith.mulf %50, %51 : vector<32x14xf32>
    %53 = arith.addf %47, %52 : vector<32x14xf32>
    %54 = vector.extract_strided_slice %2 {offsets = [0, 3], sizes = [32, 1], strides = [1, 1]} : vector<32x5xf32> to vector<32x1xf32>
    %55 = vector.extract_strided_slice %1 {offsets = [5, 0], sizes = [1, 14], strides = [1, 1]} : vector<9x14xf32> to vector<1x14xf32>
    %56 = vector.broadcast %54 : vector<32x1xf32> to vector<32x14xf32>
    %57 = vector.broadcast %55 : vector<1x14xf32> to vector<32x14xf32>
    %58 = arith.mulf %56, %57 : vector<32x14xf32>
    %59 = arith.addf %53, %58 : vector<32x14xf32>
    %60 = vector.extract_strided_slice %2 {offsets = [0, 4], sizes = [32, 1], strides = [1, 1]} : vector<32x5xf32> to vector<32x1xf32>
    %61 = vector.extract_strided_slice %1 {offsets = [6, 0], sizes = [1, 14], strides = [1, 1]} : vector<9x14xf32> to vector<1x14xf32>
    %62 = vector.broadcast %60 : vector<32x1xf32> to vector<32x14xf32>
    %63 = vector.broadcast %61 : vector<1x14xf32> to vector<32x14xf32>
    %64 = arith.mulf %62, %63 : vector<32x14xf32>
    %65 = arith.addf %59, %64 : vector<32x14xf32>
    %66 = vector.broadcast %3 : vector<32x1xf32> to vector<32x14xf32>
    %67 = arith.addf %65, %66 : vector<32x14xf32>
    %cst_6 = arith.constant 0.000000e+00 : f32
    %68 = vector.broadcast %cst_6 : f32 to vector<32x14xf32>
    %69 = arith.maximumf %67, %68 : vector<32x14xf32>
    %70 = vector.extract_strided_slice %2 {offsets = [0, 0], sizes = [32, 1], strides = [1, 1]} : vector<32x5xf32> to vector<32x1xf32>
    %71 = vector.extract_strided_slice %1 {offsets = [4, 0], sizes = [1, 14], strides = [1, 1]} : vector<9x14xf32> to vector<1x14xf32>
    %72 = vector.broadcast %70 : vector<32x1xf32> to vector<32x14xf32>
    %73 = vector.broadcast %71 : vector<1x14xf32> to vector<32x14xf32>
    %74 = arith.mulf %72, %73 : vector<32x14xf32>
    %75 = vector.extract_strided_slice %2 {offsets = [0, 1], sizes = [32, 1], strides = [1, 1]} : vector<32x5xf32> to vector<32x1xf32>
    %76 = vector.extract_strided_slice %1 {offsets = [5, 0], sizes = [1, 14], strides = [1, 1]} : vector<9x14xf32> to vector<1x14xf32>
    %77 = vector.broadcast %75 : vector<32x1xf32> to vector<32x14xf32>
    %78 = vector.broadcast %76 : vector<1x14xf32> to vector<32x14xf32>
    %79 = arith.mulf %77, %78 : vector<32x14xf32>
    %80 = arith.addf %74, %79 : vector<32x14xf32>
    %81 = vector.extract_strided_slice %2 {offsets = [0, 2], sizes = [32, 1], strides = [1, 1]} : vector<32x5xf32> to vector<32x1xf32>
    %82 = vector.extract_strided_slice %1 {offsets = [6, 0], sizes = [1, 14], strides = [1, 1]} : vector<9x14xf32> to vector<1x14xf32>
    %83 = vector.broadcast %81 : vector<32x1xf32> to vector<32x14xf32>
    %84 = vector.broadcast %82 : vector<1x14xf32> to vector<32x14xf32>
    %85 = arith.mulf %83, %84 : vector<32x14xf32>
    %86 = arith.addf %80, %85 : vector<32x14xf32>
    %87 = vector.extract_strided_slice %2 {offsets = [0, 3], sizes = [32, 1], strides = [1, 1]} : vector<32x5xf32> to vector<32x1xf32>
    %88 = vector.extract_strided_slice %1 {offsets = [7, 0], sizes = [1, 14], strides = [1, 1]} : vector<9x14xf32> to vector<1x14xf32>
    %89 = vector.broadcast %87 : vector<32x1xf32> to vector<32x14xf32>
    %90 = vector.broadcast %88 : vector<1x14xf32> to vector<32x14xf32>
    %91 = arith.mulf %89, %90 : vector<32x14xf32>
    %92 = arith.addf %86, %91 : vector<32x14xf32>
    %93 = vector.extract_strided_slice %2 {offsets = [0, 4], sizes = [32, 1], strides = [1, 1]} : vector<32x5xf32> to vector<32x1xf32>
    %94 = vector.extract_strided_slice %1 {offsets = [8, 0], sizes = [1, 14], strides = [1, 1]} : vector<9x14xf32> to vector<1x14xf32>
    %95 = vector.broadcast %93 : vector<32x1xf32> to vector<32x14xf32>
    %96 = vector.broadcast %94 : vector<1x14xf32> to vector<32x14xf32>
    %97 = arith.mulf %95, %96 : vector<32x14xf32>
    %98 = arith.addf %92, %97 : vector<32x14xf32>
    %99 = vector.broadcast %3 : vector<32x1xf32> to vector<32x14xf32>
    %100 = arith.addf %98, %99 : vector<32x14xf32>
    %cst_7 = arith.constant 0.000000e+00 : f32
    %101 = vector.broadcast %cst_7 : f32 to vector<32x14xf32>
    %102 = arith.maximumf %100, %101 : vector<32x14xf32>
    %103 = tpu.concatenate %36, %69, %102 in 0 : vector<32x14xf32>, vector<32x14xf32>, vector<32x14xf32> -> vector<96x14xf32>
    %c0_8 = arith.constant 0 : index
    %c0_9 = arith.constant 0 : index
    %104 = vector.load %arg5[%c0_8, %c0_9] : memref<64x96xf32, #tpu.memory_space<vmem>>, vector<64x96xf32>
    %cst_10 = arith.constant dense<0.000000e+00> : vector<64x14xf32>
    %105 = tpu.matmul %104, %103, %cst_10 {dimension_numbers = #tpu.dot_dimension_numbers<[1], [0], [0], [1], [0, 0, 1, 1], [], []>} : vector<64x96xf32>, vector<96x14xf32>, vector<64x14xf32> -> vector<64x14xf32>
    %c0_11 = arith.constant 0 : index
    %c0_12 = arith.constant 0 : index
    %106 = vector.load %arg6[%c0_11, %c0_12] : memref<64x1xf32, #tpu.memory_space<vmem>>, vector<64x1xf32>
    %107 = vector.broadcast %106 : vector<64x1xf32> to vector<64x14xf32>
    %108 = arith.addf %105, %107 : vector<64x14xf32>
    %109 = arith.negf %108 : vector<64x14xf32>
    %110 = math.exp %109 : vector<64x14xf32>
    %cst_13 = arith.constant 1.000000e+00 : f32
    %111 = vector.broadcast %cst_13 : f32 to vector<64x14xf32>
    %112 = arith.addf %111, %110 : vector<64x14xf32>
    %113 = arith.divf %111, %112 : vector<64x14xf32>
    %c0_14 = arith.constant 0 : index
    %c0_15 = arith.constant 0 : index
    %c0_16 = arith.constant 0 : index
    %114 = vector.load %arg7[%c0_14, %c0_15, %c0_16] : memref<1x64x14xf32, #tpu.memory_space<vmem>>, vector<1x64x14xf32>
    %115 = vector.shape_cast %114 : vector<1x64x14xf32> to vector<64x14xf32>
    %116 = vector.shape_cast %113 : vector<64x14xf32> to vector<1x64x14xf32>
    tpu.vector_store %arg7[%c0_14, %c0_15, %c0_16], %116 {strides = array<i32>} : memref<1x64x14xf32, #tpu.memory_space<vmem>>, vector<1x64x14xf32>,
    return
  }
  func.func @transform_0(%arg0: i32, %arg1: i32) -> (i32, i32, i32) {
    %c0_i32 = arith.constant 0 : i32
    %c0_i32_0 = arith.constant 0 : i32
    return %arg0, %c0_i32, %arg1 : i32, i32, i32
  }
  func.func @transform_1(%arg0: i32, %arg1: i32) -> (i32, i32) {
    %c0_i32 = arith.constant 0 : i32
    %c0_i32_0 = arith.constant 0 : i32
    %c0_i32_1 = arith.constant 0 : i32
    return %c0_i32, %c0_i32_0 : i32, i32
  }
  func.func @transform_2(%arg0: i32, %arg1: i32) -> (i32, i32) {
    %c0_i32 = arith.constant 0 : i32
    %c0_i32_0 = arith.constant 0 : i32
    %c0_i32_1 = arith.constant 0 : i32
    return %c0_i32, %c0_i32_0 : i32, i32
  }
  func.func @transform_3(%arg0: i32, %arg1: i32) -> (i32, i32) {
    %c0_i32 = arith.constant 0 : i32
    %c0_i32_0 = arith.constant 0 : i32
    %c0_i32_1 = arith.constant 0 : i32
    return %c0_i32, %c0_i32_0 : i32, i32
  }
  func.func @transform_4(%arg0: i32, %arg1: i32) -> (i32, i32) {
    %c0_i32 = arith.constant 0 : i32
    %c0_i32_0 = arith.constant 0 : i32
    %c0_i32_1 = arith.constant 0 : i32
    return %c0_i32, %c0_i32_0 : i32, i32
  }
  func.func @transform_5(%arg0: i32, %arg1: i32) -> (i32, i32, i32) {
    %c0_i32 = arith.constant 0 : i32
    %c0_i32_0 = arith.constant 0 : i32
    return %arg0, %c0_i32, %arg1 : i32, i32, i32
  }
}

</mosaic_0001>

<llo_original>
// kernel: encoder_forward.1
$region0: #{encoder_forward.1}
  #allocation0 [shape = 'u32[]', space=smem, size = 0x4, offset = 0x4, fixed_abs, tag = 'smem constant byte address 0x4 - core index']
  #allocation1 [shape = 'u32[144,128]{1,0:T(1,128)}', space=vmem, size = 0x12000, scoped, tag = 'internal scratch']
  %s0 = inlined_call_operand.vmem [shape: f32[2,9,14], index: 0, kind: input, shape index: {}]
  %s1 = inlined_call_operand.vmem [shape: f32[32,5], index: 1, kind: input, shape index: {}]
  %s2 = inlined_call_operand.vmem [shape: f32[32,1], index: 2, kind: input, shape index: {}]
  %s3 = inlined_call_operand.vmem [shape: f32[64,96], index: 3, kind: input, shape index: {}]
  %s4 = inlined_call_operand.vmem [shape: f32[64,1], index: 4, kind: input, shape index: {}]
  %s5 = inlined_call_operand.vmem [shape: f32[2,64,14], index: 5, kind: output, shape index: {}]
  %s6 = sld [smem:[#allocation0]]
  $region53: #{encoder_forward.1} parent=0
    _
  %s8 = ssub.s32 1, %s6
  %s9 = scalar_select 0, %s8, %s6
  loop: start=0, step=1, limit=4
  $region2: #{encoder_forward.1} parent=0 // loop_pre_header
    _
  $region3: #{encoder_forward.1} parent=0 // loop_header
    %s11 = sphi 0, %s15
    %p12 = scmp.ge.s32.totalorder %s11, 4
    %s18 = sphi 0, %s30
    %s19 = sphi 0, %s26
    %s20 = sphi 0, %s18
    %s21 = sphi 0, %s19
    %s22 = sphi 0, %s20
    %s23 = sphi 0, %s21
    %s35 = sphi 0, %s37
    %s38 = sphi 0, %s35
    %s39 = sphi 0, %s38
    %s55 = sphi 0, %s39
    %s59 = sphi 0, %s59
    %s61 = sphi 0, %s59
    %s62 = sphi 0, %s61
    %s76 = sphi 0, %s62
    %s80 = sphi 0, %s80
    %s82 = sphi 0, %s80
    %s83 = sphi 0, %s82
    %s97 = sphi 0, %s83
    %s101 = sphi 0, %s101
    %s103 = sphi 0, %s101
    %s104 = sphi 0, %s103
    %s118 = sphi 0, %s104
    %s122 = sphi 0, %s122
    %s124 = sphi 0, %s122
    %s125 = sphi 0, %s124
    %s139 = sphi 0, %s125
    %s147 = sphi 0, %s149
    %s150 = sphi 0, %s147
    %s151 = sphi 0, %s150
    %s167 = sphi 0, %s151
  $region4: #{encoder_forward.1} parent=0 // loop_header_branch
    %14 = sbr.rel (%p12) target = $region8
  $region5: #{encoder_forward.1} parent=0 // loop_body
    %s16 = ssub.s32 %s11, 1
    %s17 = ssub.s32 %s11, 2
    %s24 = sadd.s32 1, %s19
    %p25 = scmp.ge.s32.totalorder %s24, 1
    %s26 = scalar_select %p25, 0, %s24
    %s27 = sadd.s32 1, %s18
    %s28 = scalar_select %p25, %s27, %s18
    %p29 = scmp.ge.s32.totalorder %s28, 2
    %s30 = scalar_select %p29, 0, %s28
    %s31 = ssub.s32 %s18, %s30
    %s32 = ssub.s32 %s19, %s26
    %s33 = sor.u32 %s31, %s32
    %p34 = scmp.eq.s32.totalorder %s33, 0
    %s36 = sadd.s32 %s35, 1
    %s37 = scalar_select %p34, %s35, %s36
    %p40 = pneg %p34
    %p41 = scmp.eq.s32.totalorder %s11, 1
    %p42 = por %p40, %p41
    %p43 = scmp.ne.s32.totalorder %s35, %s38
    %p44 = scmp.eq.s32.totalorder %s11, 0
    %p45 = por %p43, %p44
    %p46 = scmp.ne.s32.totalorder %s35, %s38
    %p47 = scmp.eq.s32.totalorder %s16, 1
    %p48 = por %p46, %p47
    %p49 = scmp.ne.s32.totalorder %s38, %s39
    %p50 = scmp.eq.s32.totalorder %s16, 0
    %p51 = por %p49, %p50
    %p52 = scmp.ne.s32.totalorder %s38, %s39
    %p53 = scmp.eq.s32.totalorder %s17, 1
    %p54 = por %p52, %p53
    %p56 = scmp.ne.s32.totalorder %s39, %s55
    %p57 = scmp.eq.s32.totalorder %s17, 0
    %p58 = por %p56, %p57
    %s60 = sadd.s32 %s59, 1
    %p63 = scmp.eq.s32.totalorder %s11, 1
    %p64 = scmp.ne.s32.totalorder %s59, %s61
    %p65 = scmp.eq.s32.totalorder %s11, 0
    %p66 = por %p64, %p65
    %p67 = scmp.ne.s32.totalorder %s59, %s61
    %p68 = scmp.eq.s32.totalorder %s16, 1
    %p69 = por %p67, %p68
    %p70 = scmp.ne.s32.totalorder %s61, %s62
    %p71 = scmp.eq.s32.totalorder %s16, 0
    %p72 = por %p70, %p71
    %p73 = scmp.ne.s32.totalorder %s61, %s62
    %p74 = scmp.eq.s32.totalorder %s17, 1
    %p75 = por %p73, %p74
    %p77 = scmp.ne.s32.totalorder %s62, %s76
    %p78 = scmp.eq.s32.totalorder %s17, 0
    %p79 = por %p77, %p78
    %s81 = sadd.s32 %s80, 1
    %p84 = scmp.eq.s32.totalorder %s11, 1
    %p85 = scmp.ne.s32.totalorder %s80, %s82
    %p86 = scmp.eq.s32.totalorder %s11, 0
    %p87 = por %p85, %p86
    %p88 = scmp.ne.s32.totalorder %s80, %s82
    %p89 = scmp.eq.s32.totalorder %s16, 1
    %p90 = por %p88, %p89
    %p91 = scmp.ne.s32.totalorder %s82, %s83
    %p92 = scmp.eq.s32.totalorder %s16, 0
    %p93 = por %p91, %p92
    %p94 = scmp.ne.s32.totalorder %s82, %s83
    %p95 = scmp.eq.s32.totalorder %s17, 1
    %p96 = por %p94, %p95
    %p98 = scmp.ne.s32.totalorder %s83, %s97
    %p99 = scmp.eq.s32.totalorder %s17, 0
    %p100 = por %p98, %p99
    %s102 = sadd.s32 %s101, 1
    %p105 = scmp.eq.s32.totalorder %s11, 1
    %p106 = scmp.ne.s32.totalorder %s101, %s103
    %p107 = scmp.eq.s32.totalorder %s11, 0
    %p108 = por %p106, %p107
    %p109 = scmp.ne.s32.totalorder %s101, %s103
    %p110 = scmp.eq.s32.totalorder %s16, 1
    %p111 = por %p109, %p110
    %p112 = scmp.ne.s32.totalorder %s103, %s104
    %p113 = scmp.eq.s32.totalorder %s16, 0
    %p114 = por %p112, %p113
    %p115 = scmp.ne.s32.totalorder %s103, %s104
    %p116 = scmp.eq.s32.totalorder %s17, 1
    %p117 = por %p115, %p116
    %p119 = scmp.ne.s32.totalorder %s104, %s118
    %p120 = scmp.eq.s32.totalorder %s17, 0
    %p121 = por %p119, %p120
    %s123 = sadd.s32 %s122, 1
    %p126 = scmp.eq.s32.totalorder %s11, 1
    %p127 = scmp.ne.s32.totalorder %s122, %s124
    %p128 = scmp.eq.s32.totalorder %s11, 0
    %p129 = por %p127, %p128
    %p130 = scmp.ne.s32.totalorder %s122, %s124
    %p131 = scmp.eq.s32.totalorder %s16, 1
    %p132 = por %p130, %p131
    %p133 = scmp.ne.s32.totalorder %s124, %s125
    %p134 = scmp.eq.s32.totalorder %s16, 0
    %p135 = por %p133, %p134
    %p136 = scmp.ne.s32.totalorder %s124, %s125
    %p137 = scmp.eq.s32.totalorder %s17, 1
    %p138 = por %p136, %p137
    %p140 = scmp.ne.s32.totalorder %s125, %s139
    %p141 = scmp.eq.s32.totalorder %s17, 0
    %p142 = por %p140, %p141
    %s143 = ssub.s32 %s18, %s30
    %s144 = ssub.s32 %s19, %s26
    %s145 = sor.u32 %s143, %s144
    %p146 = scmp.eq.s32.totalorder %s145, 0
    %s148 = sadd.s32 %s147, 1
    %s149 = scalar_select %p146, %s147, %s148
    %p152 = pneg %p146
    %p153 = scmp.eq.s32.totalorder %s11, 1
    %p154 = por %p152, %p153
    %p155 = scmp.ne.s32.totalorder %s147, %s150
    %p156 = scmp.eq.s32.totalorder %s11, 0
    %p157 = por %p155, %p156
    %p158 = scmp.ne.s32.totalorder %s147, %s150
    %p159 = scmp.eq.s32.totalorder %s16, 1
    %p160 = por %p158, %p159
    %p161 = scmp.ne.s32.totalorder %s150, %s151
    %p162 = scmp.eq.s32.totalorder %s16, 0
    %p163 = por %p161, %p162
    %p164 = scmp.ne.s32.totalorder %s150, %s151
    %p165 = scmp.eq.s32.totalorder %s17, 1
    %p166 = por %p164, %p165
    %p168 = scmp.ne.s32.totalorder %s151, %s167
    %p169 = scmp.eq.s32.totalorder %s17, 0
    %p170 = por %p168, %p169
    %p171 = scmp.le.s32.totalorder 1, %s11
    %p172 = scmp.lt.s32.totalorder %s11, 3
    %p173 = pnand %p171, %p172
    %p174 = pneg %p173
    // Predicated region
    $region9: #{encoder_forward.1} parent=5 // pred_check
      _
    $region10: #{encoder_forward.1} parent=5 // pred_check_branch
      %176 = sbr.rel (%p173) target = $region12
    $region11: #{encoder_forward.1} parent=5 // pred_region
      %s177 = ssub.s32 %s11, 1
      // Predicated region
      $region13: #{encoder_forward.1} parent=11 // pred_check
        %p178 = pneg %p72
      $region14: #{encoder_forward.1} parent=11 // pred_check_branch
        %180 = sbr.rel (%p178) target = $region16
      $region15: #{encoder_forward.1} parent=11 // pred_region
        _
      $region16: #{encoder_forward.1} parent=11 // pred_fallthru
        _
      // Predicated region
      $region17: #{encoder_forward.1} parent=11 // pred_check
        %p181 = pneg %p93
      $region18: #{encoder_forward.1} parent=11 // pred_check_branch
        %183 = sbr.rel (%p181) target = $region20
      $region19: #{encoder_forward.1} parent=11 // pred_region
        _
      $region20: #{encoder_forward.1} parent=11 // pred_fallthru
        _
      // Predicated region
      $region21: #{encoder_forward.1} parent=11 // pred_check
        %p184 = pneg %p114
      $region22: #{encoder_forward.1} parent=11 // pred_check_branch
        %186 = sbr.rel (%p184) target = $region24
      $region23: #{encoder_forward.1} parent=11 // pred_region
        _
      $region24: #{encoder_forward.1} parent=11 // pred_fallthru
        _
      // Predicated region
      $region25: #{encoder_forward.1} parent=11 // pred_check
        %p187 = pneg %p135
      $region26: #{encoder_forward.1} parent=11 // pred_check_branch
        %189 = sbr.rel (%p187) target = $region28
      $region27: #{encoder_forward.1} parent=11 // pred_region
        _
      $region28: #{encoder_forward.1} parent=11 // pred_fallthru
        _
    $region12: #{encoder_forward.1} parent=5 // pred_fallthru
      _
    %p190 = scmp.lt.s32.totalorder %s11, 2
    // Predicated region
    $region29: #{encoder_forward.1} parent=5 // pred_check
      %p191 = pneg %p190
    $region30: #{encoder_forward.1} parent=5 // pred_check_branch
      %193 = sbr.rel (%p191) target = $region32
    $region31: #{encoder_forward.1} parent=5 // pred_region
      // Predicated region
      $region33: #{encoder_forward.1} parent=31 // pred_check
        %p194 = pneg %p45
      $region34: #{encoder_forward.1} parent=31 // pred_check_branch
        %196 = sbr.rel (%p194) target = $region36
      $region35: #{encoder_forward.1} parent=31 // pred_region
        %p197 = scmp.lt.s32.totalorder %s18, 1
        %s198 = scalar_select %p197, %s18, 1
        %p199 = scmp.lt.s32.totalorder %s19, 0
        %s200 = scalar_select %p199, %s19, 0
        %s201 = smul.addr %s198, 2
        %s202 = sadd.s32 %s200, %s201
        %s203 = smul.addr %s202, 8
        %s204 = scalar_lea.vmem %s0, %s203
      $region36: #{encoder_forward.1} parent=31 // pred_fallthru
        _
    $region32: #{encoder_forward.1} parent=5 // pred_fallthru
      _
    %p205 = scmp.le.s32.totalorder 1, %s11
    %p206 = scmp.lt.s32.totalorder %s11, 3
    %p207 = pnand %p205, %p206
    %p208 = pneg %p207
    // Predicated region
    $region37: #{encoder_forward.1} parent=5 // pred_check
      _
    $region38: #{encoder_forward.1} parent=5 // pred_check_branch
      %210 = sbr.rel (%p207) target = $region40
    $region39: #{encoder_forward.1} parent=5 // pred_region
      %s211 = ssub.s32 %s11, 1
      %p212 = scmp.lt.s32.totalorder %s20, 1
      %s213 = scalar_select %p212, %s20, 1
      %p214 = scmp.lt.s32.totalorder %s21, 0
      %s215 = scalar_select %p214, %s21, 0
      %s216 = smul.addr %s213, 2
      %s217 = sadd.s32 %s215, %s216
      %s218 = smul.addr %s217, 8
      %s219 = scalar_lea.vmem %s0, %s218
      %p220 = pneg %p51
      %p221 = pneg %p48
      %p222 = pneg %p72
      %p223 = pneg %p69
      %p224 = pneg %p93
      %p225 = pneg %p90
      %p226 = pneg %p114
      %p227 = pneg %p111
      %p228 = pneg %p135
      %p229 = pneg %p132
      %p230 = pneg %p163
      %p231 = pneg %p160
      %p232 = scmp.lt.s32.totalorder %s20, 1
      %s233 = scalar_select %p232, %s20, 1
      %p234 = scmp.lt.s32.totalorder %s21, 0
      %s235 = scalar_select %p234, %s21, 0
      %s236 = smul.addr %s233, 8
      %s237 = sadd.s32 %s235, %s236
      %s238 = smul.addr %s237, 8
      %s239 = scalar_lea.vmem %s5, %s238
      %p240 = scmp.lt.s32.totalorder %s20, 1
      %s241 = scalar_select %p240, %s20, 1
      %p242 = scmp.lt.s32.totalorder %s21, 0
      %s243 = scalar_select %p242, %s21, 0
      %s244 = smul.addr %s241, 2
      %s245 = sadd.s32 %s243, %s244
      %s246 = smul.addr %s245, 8
      %s247 = scalar_lea.vmem %s0, %s246
      %p248 = scmp.lt.s32.totalorder %s20, 1
      %s249 = scalar_select %p248, %s20, 1
      %p250 = scmp.lt.s32.totalorder %s21, 0
      %s251 = scalar_select %p250, %s21, 0
      %s252 = smul.addr %s249, 8
      %s253 = sadd.s32 %s251, %s252
      %s254 = smul.addr %s253, 8
      %s255 = scalar_lea.vmem %s5, %s254
      %v256 = vld [vmem:[%s247] sm:$0xff]
      %v257 = vld [vmem:[%s247 + $0x8] sm:$0x1]
      %v258 = vld [vmem:[%s1] sm:$0xff]
      %v259 = vld [vmem:[%s1 + $0x8] sm:$0xff]
      %v260 = vld [vmem:[%s1 + $0x10] sm:$0xff]
      %v261 = vld [vmem:[%s1 + $0x18] sm:$0xff]
      %v262 = vld [vmem:[%s2] sm:$0xff]
      %v263 = vld [vmem:[%s2 + $0x8] sm:$0xff]
      %v264 = vld [vmem:[%s2 + $0x10] sm:$0xff]
      %v265 = vld [vmem:[%s2 + $0x18] sm:$0xff]
      %267 = vset.pattern.permute.xlu0 0
      %268 = vperm.xlu0 %267, %v258
      %v269 = vpop.permute.xlu0 %268
      %272 = vset.pattern.permute.xlu0 0
      %273 = vperm.xlu0 %272, %v259
      %v274 = vpop.permute.xlu0 %273
      %277 = vset.pattern.permute.xlu0 0
      %278 = vperm.xlu0 %277, %v260
      %v279 = vpop.permute.xlu0 %278
      %282 = vset.pattern.permute.xlu0 0
      %283 = vperm.xlu0 %282, %v261
      %v284 = vpop.permute.xlu0 %283
      %v286 = vlaneseq
      %v287 = vshrl.u32 %v286, 7
      %v288 = vsub.s32 0, %v287
      %v289 = vrot.slane %v256, %v288
      %v290 = vmul.f32 %v269, %v289
      %v291 = vmul.f32 %v274, %v289
      %v292 = vmul.f32 %v279, %v289
      %v293 = vmul.f32 %v284, %v289
      %294 = vset.pattern.permute.xlu0 1
      %295 = vperm.xlu0 %294, %v258
      %v296 = vpop.permute.xlu0 %295
      %298 = vset.pattern.permute.xlu0 1
      %299 = vperm.xlu0 %298, %v259
      %v300 = vpop.permute.xlu0 %299
      %302 = vset.pattern.permute.xlu0 1
      %303 = vperm.xlu0 %302, %v260
      %v304 = vpop.permute.xlu0 %303
      %306 = vset.pattern.permute.xlu0 1
      %307 = vperm.xlu0 %306, %v261
      %v308 = vpop.permute.xlu0 %307
      %v310 = vlaneseq
      %v311 = vshrl.u32 %v310, 7
      %v312 = vsub.s32 1, %v311
      %v313 = vrot.slane %v256, %v312
      %v314 = vmul.f32 %v296, %v313
      %v315 = vmul.f32 %v300, %v313
      %v316 = vmul.f32 %v304, %v313
      %v317 = vmul.f32 %v308, %v313
      %v318 = vadd.f32 %v290, %v314
      %v319 = vadd.f32 %v291, %v315
      %v320 = vadd.f32 %v292, %v316
      %v321 = vadd.f32 %v293, %v317
      %322 = vset.pattern.permute.xlu0 2
      %323 = vperm.xlu0 %322, %v258
      %v324 = vpop.permute.xlu0 %323
      %326 = vset.pattern.permute.xlu0 2
      %327 = vperm.xlu0 %326, %v259
      %v328 = vpop.permute.xlu0 %327
      %330 = vset.pattern.permute.xlu0 2
      %331 = vperm.xlu0 %330, %v260
      %v332 = vpop.permute.xlu0 %331
      %334 = vset.pattern.permute.xlu0 2
      %335 = vperm.xlu0 %334, %v261
      %v336 = vpop.permute.xlu0 %335
      %v338 = vlaneseq
      %v339 = vshrl.u32 %v338, 7
      %v340 = vsub.s32 2, %v339
      %v341 = vrot.slane %v256, %v340
      %v342 = vmul.f32 %v324, %v341
      %v343 = vmul.f32 %v328, %v341
      %v344 = vmul.f32 %v332, %v341
      %v345 = vmul.f32 %v336, %v341
      %v346 = vadd.f32 %v318, %v342
      %v347 = vadd.f32 %v319, %v343
      %v348 = vadd.f32 %v320, %v344
      %v349 = vadd.f32 %v321, %v345
      %350 = vset.pattern.permute.xlu0 3
      %351 = vperm.xlu0 %350, %v258
      %v352 = vpop.permute.xlu0 %351
      %354 = vset.pattern.permute.xlu0 3
      %355 = vperm.xlu0 %354, %v259
      %v356 = vpop.permute.xlu0 %355
      %358 = vset.pattern.permute.xlu0 3
      %359 = vperm.xlu0 %358, %v260
      %v360 = vpop.permute.xlu0 %359
      %362 = vset.pattern.permute.xlu0 3
      %363 = vperm.xlu0 %362, %v261
      %v364 = vpop.permute.xlu0 %363
      %v366 = vlaneseq
      %v367 = vshrl.u32 %v366, 7
      %v368 = vsub.s32 3, %v367
      %v369 = vrot.slane %v256, %v368
      %v370 = vmul.f32 %v352, %v369
      %v371 = vmul.f32 %v356, %v369
      %v372 = vmul.f32 %v360, %v369
      %v373 = vmul.f32 %v364, %v369
      %v374 = vadd.f32 %v346, %v370
      %v375 = vadd.f32 %v347, %v371
      %v376 = vadd.f32 %v348, %v372
      %v377 = vadd.f32 %v349, %v373
      %378 = vset.pattern.permute.xlu0 4
      %379 = vperm.xlu0 %378, %v258
      %v380 = vpop.permute.xlu0 %379
      %382 = vset.pattern.permute.xlu0 4
      %383 = vperm.xlu0 %382, %v259
      %v384 = vpop.permute.xlu0 %383
      %386 = vset.pattern.permute.xlu0 4
      %387 = vperm.xlu0 %386, %v260
      %v388 = vpop.permute.xlu0 %387
      %390 = vset.pattern.permute.xlu0 4
      %391 = vperm.xlu0 %390, %v261
      %v392 = vpop.permute.xlu0 %391
      %v394 = vlaneseq
      %v395 = vshrl.u32 %v394, 7
      %v396 = vsub.s32 4, %v395
      %v397 = vrot.slane %v256, %v396
      %v398 = vmul.f32 %v380, %v397
      %v399 = vmul.f32 %v384, %v397
      %v400 = vmul.f32 %v388, %v397
      %v401 = vmul.f32 %v392, %v397
      %v402 = vadd.f32 %v374, %v398
      %v403 = vadd.f32 %v375, %v399
      %v404 = vadd.f32 %v376, %v400
      %v405 = vadd.f32 %v377, %v401
      %407 = vset.pattern.permute.xlu0 0
      %408 = vperm.xlu0 %407, %v262
      %v409 = vpop.permute.xlu0 %408
      %412 = vset.pattern.permute.xlu0 0
      %413 = vperm.xlu0 %412, %v263
      %v414 = vpop.permute.xlu0 %413
      %417 = vset.pattern.permute.xlu0 0
      %418 = vperm.xlu0 %417, %v264
      %v419 = vpop.permute.xlu0 %418
      %422 = vset.pattern.permute.xlu0 0
      %423 = vperm.xlu0 %422, %v265
      %v424 = vpop.permute.xlu0 %423
      %v426 = vadd.f32 %v402, %v409
      %v427 = vadd.f32 %v403, %v414
      %v428 = vadd.f32 %v404, %v419
      %v429 = vadd.f32 %v405, %v424
      %v430 = vmax.f32 %v426, 0.0
      %v431 = vmax.f32 %v427, 0.0
      %v432 = vmax.f32 %v428, 0.0
      %v433 = vmax.f32 %v429, 0.0
      %v434 = vmul.f32 %v269, %v341
      %v435 = vmul.f32 %v274, %v341
      %v436 = vmul.f32 %v279, %v341
      %v437 = vmul.f32 %v284, %v341
      %v438 = vmul.f32 %v296, %v369
      %v439 = vmul.f32 %v300, %v369
      %v440 = vmul.f32 %v304, %v369
      %v441 = vmul.f32 %v308, %v369
      %v442 = vadd.f32 %v434, %v438
      %v443 = vadd.f32 %v435, %v439
      %v444 = vadd.f32 %v436, %v440
      %v445 = vadd.f32 %v437, %v441
      %v446 = vmul.f32 %v324, %v397
      %v447 = vmul.f32 %v328, %v397
      %v448 = vmul.f32 %v332, %v397
      %v449 = vmul.f32 %v336, %v397
      %v450 = vadd.f32 %v442, %v446
      %v451 = vadd.f32 %v443, %v447
      %v452 = vadd.f32 %v444, %v448
      %v453 = vadd.f32 %v445, %v449
      %v454 = vlaneseq
      %v455 = vshrl.u32 %v454, 7
      %v456 = vsub.s32 5, %v455
      %v457 = vrot.slane %v256, %v456
      %v458 = vmul.f32 %v352, %v457
      %v459 = vmul.f32 %v356, %v457
      %v460 = vmul.f32 %v360, %v457
      %v461 = vmul.f32 %v364, %v457
      %v462 = vadd.f32 %v450, %v458
      %v463 = vadd.f32 %v451, %v459
      %v464 = vadd.f32 %v452, %v460
      %v465 = vadd.f32 %v453, %v461
      %v466 = vlaneseq
      %v467 = vshrl.u32 %v466, 7
      %v468 = vsub.s32 6, %v467
      %v469 = vrot.slane %v256, %v468
      %v470 = vmul.f32 %v380, %v469
      %v471 = vmul.f32 %v384, %v469
      %v472 = vmul.f32 %v388, %v469
      %v473 = vmul.f32 %v392, %v469
      %v474 = vadd.f32 %v462, %v470
      %v475 = vadd.f32 %v463, %v471
      %v476 = vadd.f32 %v464, %v472
      %v477 = vadd.f32 %v465, %v473
      %v478 = vadd.f32 %v474, %v409
      %v479 = vadd.f32 %v475, %v414
      %v480 = vadd.f32 %v476, %v419
      %v481 = vadd.f32 %v477, %v424
      %v482 = vmax.f32 %v478, 0.0
      %v483 = vmax.f32 %v479, 0.0
      %v484 = vmax.f32 %v480, 0.0
      %v485 = vmax.f32 %v481, 0.0
      %v486 = vmul.f32 %v269, %v397
      %v487 = vmul.f32 %v274, %v397
      %v488 = vmul.f32 %v279, %v397
      %v489 = vmul.f32 %v284, %v397
      %v490 = vmul.f32 %v296, %v457
      %v491 = vmul.f32 %v300, %v457
      %v492 = vmul.f32 %v304, %v457
      %v493 = vmul.f32 %v308, %v457
      %v494 = vadd.f32 %v486, %v490
      %v495 = vadd.f32 %v487, %v491
      %v496 = vadd.f32 %v488, %v492
      %v497 = vadd.f32 %v489, %v493
      %v498 = vmul.f32 %v324, %v469
      %v499 = vmul.f32 %v328, %v469
      %v500 = vmul.f32 %v332, %v469
      %v501 = vmul.f32 %v336, %v469
      %v502 = vadd.f32 %v494, %v498
      %v503 = vadd.f32 %v495, %v499
      %v504 = vadd.f32 %v496, %v500
      %v505 = vadd.f32 %v497, %v501
      %v506 = vlaneseq
      %v507 = vshrl.u32 %v506, 7
      %v508 = vsub.s32 7, %v507
      %v509 = vrot.slane %v256, %v508
      %v510 = vmul.f32 %v352, %v509
      %v511 = vmul.f32 %v356, %v509
      %v512 = vmul.f32 %v360, %v509
      %v513 = vmul.f32 %v364, %v509
      %v514 = vadd.f32 %v502, %v510
      %v515 = vadd.f32 %v503, %v511
      %v516 = vadd.f32 %v504, %v512
      %v517 = vadd.f32 %v505, %v513
      %v518 = vlaneseq
      %v519 = vshrl.u32 %v518, 7
      %v520 = vsub.s32 0, %v519
      %v521 = vrot.slane %v257, %v520
      %v522 = vmul.f32 %v380, %v521
      %v523 = vmul.f32 %v384, %v521
      %v524 = vmul.f32 %v388, %v521
      %v525 = vmul.f32 %v392, %v521
      %v526 = vadd.f32 %v514, %v522
      %v527 = vadd.f32 %v515, %v523
      %v528 = vadd.f32 %v516, %v524
      %v529 = vadd.f32 %v517, %v525
      %v530 = vadd.f32 %v526, %v409
      %v531 = vadd.f32 %v527, %v414
      %v532 = vadd.f32 %v528, %v419
      %v533 = vadd.f32 %v529, %v424
      %v534 = vmax.f32 %v530, 0.0
      %v535 = vmax.f32 %v531, 0.0
      %v536 = vmax.f32 %v532, 0.0
      %v537 = vmax.f32 %v533, 0.0
      %v538 = vld [vmem:[%s3] sm:$0xff]
      %v539 = vld [vmem:[%s3 + $0x8] sm:$0xff]
      %v540 = vld [vmem:[%s3 + $0x10] sm:$0xff]
      %v541 = vld [vmem:[%s3 + $0x18] sm:$0xff]
      %v542 = vld [vmem:[%s3 + $0x20] sm:$0xff]
      %v543 = vld [vmem:[%s3 + $0x28] sm:$0xff]
      %v544 = vld [vmem:[%s3 + $0x30] sm:$0xff]
      %v545 = vld [vmem:[%s3 + $0x38] sm:$0xff]
      %v546 = vld [vmem:[%s4] sm:$0xff]
      %v547 = vld [vmem:[%s4 + $0x8] sm:$0xff]
      %v548 = vld [vmem:[%s4 + $0x10] sm:$0xff]
      %v549 = vld [vmem:[%s4 + $0x18] sm:$0xff]
      %v550 = vld [vmem:[%s4 + $0x20] sm:$0xff]
      %v551 = vld [vmem:[%s4 + $0x28] sm:$0xff]
      %v552 = vld [vmem:[%s4 + $0x30] sm:$0xff]
      %v553 = vld [vmem:[%s4 + $0x38] sm:$0xff]
      %555 = vset.pattern.permute.xlu0 0
      %556 = vperm.xlu0 %555, %v546
      %v557 = vpop.permute.xlu0 %556
      %560 = vset.pattern.permute.xlu0 0
      %561 = vperm.xlu0 %560, %v547
      %v562 = vpop.permute.xlu0 %561
      %565 = vset.pattern.permute.xlu0 0
      %566 = vperm.xlu0 %565, %v548
      %v567 = vpop.permute.xlu0 %566
      %570 = vset.pattern.permute.xlu0 0
      %571 = vperm.xlu0 %570, %v549
      %v572 = vpop.permute.xlu0 %571
      %575 = vset.pattern.permute.xlu0 0
      %576 = vperm.xlu0 %575, %v550
      %v577 = vpop.permute.xlu0 %576
      %580 = vset.pattern.permute.xlu0 0
      %581 = vperm.xlu0 %580, %v551
      %v582 = vpop.permute.xlu0 %581
      %585 = vset.pattern.permute.xlu0 0
      %586 = vperm.xlu0 %585, %v552
      %v587 = vpop.permute.xlu0 %586
      %590 = vset.pattern.permute.xlu0 0
      %591 = vperm.xlu0 %590, %v553
      %v592 = vpop.permute.xlu0 %591
      %vm594 = vcmask 785408
      %v596 = vsel %vm594, %v538, 0
      %v599 = vsel %vm594, %v539, 0
      %v602 = vsel %vm594, %v540, 0
      %v605 = vsel %vm594, %v541, 0
      %v608 = vsel %vm594, %v542, 0
      %v611 = vsel %vm594, %v543, 0
      %v614 = vsel %vm594, %v544, 0
      %v617 = vsel %vm594, %v545, 0
      %619 = vmatprep.subr.mxu0 0.0
      %620 = vmatpush1.msra.mxu0 %v430
      %621 = vmatprep.subr.mxu0 0.0
      %622 = vmatpush1.msra.mxu0 %v431
      %623 = vmatprep.subr.mxu0 0.0
      %624 = vmatpush1.msra.mxu0 %v432
      %625 = vmatprep.subr.mxu0 0.0
      %626 = vmatpush1.msra.mxu0 %v433
      %627 = vmatprep.subr.mxu0 0.0
      %628 = vmatpush1.msra.mxu0 %v482
      %629 = vmatprep.subr.mxu0 0.0
      %630 = vmatpush1.msra.mxu0 %v483
      %631 = vmatprep.subr.mxu0 0.0
      %632 = vmatpush1.msra.mxu0 %v484
      %633 = vmatprep.subr.mxu0 0.0
      %634 = vmatpush1.msra.mxu0 %v485
      %635 = vmatprep.subr.mxu0 0.0
      %636 = vmatpush1.msra.mxu0 %v534
      %637 = vmatprep.subr.mxu0 0.0
      %638 = vmatpush1.msra.mxu0 %v535
      %639 = vmatprep.subr.mxu0 0.0
      %640 = vmatpush1.msra.mxu0 %v536
      %641 = vmatprep.subr.mxu0 0.0
      %642 = vmatpush1.msra.mxu0 %v537
      %643 = vmatprep.subr.mxu0 0.0
      %644 = vmatpush1.msra.mxu0 0.0
      %645 = vmatprep.subr.mxu0 0.0
      %646 = vmatpush1.msra.mxu0 0.0
      %647 = vmatprep.subr.mxu0 0.0
      %648 = vmatpush1.msra.mxu0 0.0
      %649 = vmatprep.subr.mxu0 0.0
      %650 = vmatpush1.msra.mxu0 0.0
      %651 = vmatprep.subr.mxu0 0.0
      %652 = vmatpush1.msra.mxu0 0.0
      %653 = vmatprep.subr.mxu0 0.0
      %654 = vmatpush1.msra.mxu0 0.0
      %655 = vmatprep.subr.mxu0 0.0
      %656 = vmatpush1.msra.mxu0 0.0
      %657 = vmatprep.subr.mxu0 0.0
      %658 = vmatpush1.msra.mxu0 0.0
      %659 = vmatprep.subr.mxu0 0.0
      %660 = vmatpush1.msra.mxu0 0.0
      %661 = vmatprep.subr.mxu0 0.0
      %662 = vmatpush1.msra.mxu0 0.0
      %663 = vmatprep.subr.mxu0 0.0
      %664 = vmatpush1.msra.mxu0 0.0
      %665 = vmatprep.subr.mxu0 0.0
      %666 = vmatpush1.msra.mxu0 0.0
      %667 = vmatprep.subr.mxu0 0.0
      %668 = vmatpush1.msra.mxu0 0.0
      %669 = vmatprep.subr.mxu0 0.0
      %670 = vmatpush1.msra.mxu0 0.0
      %671 = vmatprep.subr.mxu0 0.0
      %672 = vmatpush1.msra.mxu0 0.0
      %673 = vmatprep.subr.mxu0 0.0
      %674 = vmatpush1.msra.mxu0 0.0
      %675 = vmatprep.subr.mxu0 0.0
      %676 = vmatpush1.msra.mxu0 0.0
      %677 = vmatprep.subr.mxu0 0.0
      %678 = vmatpush1.msra.mxu0 0.0
      %679 = vmatprep.subr.mxu0 0.0
      %680 = vmatpush1.msra.mxu0 0.0
      %681 = vmatprep.subr.mxu0 0.0
      %682 = vmatpush1.msra.mxu0 0.0
      %683 = vmatprep.mubr.f32.mxu0 0.0
      %684 = vmatmul.mubr.f32.gmra.mrb[0].mxu0 %v596
      %v685 = vpop.f32.mrb[0].mxu0
      %v686 = vadd.f32 %v557, %v685
      %v687 = vpop.f32.mrb[0].mxu0
      %688 = vmatprep.mubr.f32.mxu0 0.0
      %689 = vmatmul.mubr.f32.gmra.mrb[0].mxu0 %v599
      %v690 = vpop.f32.mrb[0].mxu0
      %v691 = vadd.f32 %v562, %v690
      %v692 = vpop.f32.mrb[0].mxu0
      %693 = vmatprep.mubr.f32.mxu0 0.0
      %694 = vmatmul.mubr.f32.gmra.mrb[0].mxu0 %v602
      %v695 = vpop.f32.mrb[0].mxu0
      %v696 = vadd.f32 %v567, %v695
      %v697 = vpop.f32.mrb[0].mxu0
      %698 = vmatprep.mubr.f32.mxu0 0.0
      %699 = vmatmul.mubr.f32.gmra.mrb[0].mxu0 %v605
      %v700 = vpop.f32.mrb[0].mxu0
      %v701 = vadd.f32 %v572, %v700
      %v702 = vpop.f32.mrb[0].mxu0
      %703 = vmatprep.mubr.f32.mxu0 0.0
      %704 = vmatmul.mubr.f32.gmra.mrb[0].mxu0 %v608
      %v705 = vpop.f32.mrb[0].mxu0
      %v706 = vadd.f32 %v577, %v705
      %v707 = vpop.f32.mrb[0].mxu0
      %708 = vmatprep.mubr.f32.mxu0 0.0
      %709 = vmatmul.mubr.f32.gmra.mrb[0].mxu0 %v611
      %v710 = vpop.f32.mrb[0].mxu0
      %v711 = vadd.f32 %v582, %v710
      %v712 = vpop.f32.mrb[0].mxu0
      %713 = vmatprep.mubr.f32.mxu0 0.0
      %714 = vmatmul.mubr.f32.gmra.mrb[0].mxu0 %v614
      %v715 = vpop.f32.mrb[0].mxu0
      %v716 = vadd.f32 %v587, %v715
      %v717 = vpop.f32.mrb[0].mxu0
      %718 = vmatprep.mubr.f32.mxu0 0.0
      %719 = vmatmul.mubr.f32.gmra.mrb[0].mxu0 %v617
      %v720 = vpop.f32.mrb[0].mxu0
      %v721 = vadd.f32 %v592, %v720
      %v722 = vpop.f32.mrb[0].mxu0
      %723 = vdwg.mxu0
      %v724 = vxor.u32 %v686, 2147483648
      %v725 = vxor.u32 %v691, 2147483648
      %v726 = vxor.u32 %v696, 2147483648
      %v727 = vxor.u32 %v701, 2147483648
      %v728 = vxor.u32 %v706, 2147483648
      %v729 = vxor.u32 %v711, 2147483648
      %v730 = vxor.u32 %v716, 2147483648
      %v731 = vxor.u32 %v721, 2147483648
      %v732 = vmul.f32 %v724, 1.442695
      %v733 = vpow.pop %v732
      %v734 = vmul.f32 %v725, 1.442695
      %v735 = vpow.pop %v734
      %v736 = vmul.f32 %v726, 1.442695
      %v737 = vpow.pop %v736
      %v738 = vmul.f32 %v727, 1.442695
      %v739 = vpow.pop %v738
      %v740 = vmul.f32 %v728, 1.442695
      %v741 = vpow.pop %v740
      %v742 = vmul.f32 %v729, 1.442695
      %v743 = vpow.pop %v742
      %v744 = vmul.f32 %v730, 1.442695
      %v745 = vpow.pop %v744
      %v746 = vmul.f32 %v731, 1.442695
      %v747 = vpow.pop %v746
      %v748 = vadd.f32 %v733, 1.0
      %v749 = vadd.f32 %v735, 1.0
      %v750 = vadd.f32 %v737, 1.0
      %v751 = vadd.f32 %v739, 1.0
      %v752 = vadd.f32 %v741, 1.0
      %v753 = vadd.f32 %v743, 1.0
      %v754 = vadd.f32 %v745, 1.0
      %v755 = vadd.f32 %v747, 1.0
      %v756 = vrcp.pop %v748
      %v757 = vmul.f32 1.0, %v756
      %v758 = vrcp.pop %v749
      %v759 = vmul.f32 1.0, %v758
      %v760 = vrcp.pop %v750
      %v761 = vmul.f32 1.0, %v760
      %v762 = vrcp.pop %v751
      %v763 = vmul.f32 1.0, %v762
      %v764 = vrcp.pop %v752
      %v765 = vmul.f32 1.0, %v764
      %v766 = vrcp.pop %v753
      %v767 = vmul.f32 1.0, %v766
      %v768 = vrcp.pop %v754
      %v769 = vmul.f32 1.0, %v768
      %v770 = vrcp.pop %v755
      %v771 = vmul.f32 1.0, %v770
      %vm772 = vcmask 113664
      %773 = vst.msk [vmem:[%s255] sm:$0xff] %vm772, %v757
      %774 = vst.msk [vmem:[%s255 + $0x8] sm:$0xff] %vm772, %v759
      %775 = vst.msk [vmem:[%s255 + $0x10] sm:$0xff] %vm772, %v761
      %776 = vst.msk [vmem:[%s255 + $0x18] sm:$0xff] %vm772, %v763
      %777 = vst.msk [vmem:[%s255 + $0x20] sm:$0xff] %vm772, %v765
      %778 = vst.msk [vmem:[%s255 + $0x28] sm:$0xff] %vm772, %v767
      %779 = vst.msk [vmem:[%s255 + $0x30] sm:$0xff] %vm772, %v769
      %780 = vst.msk [vmem:[%s255 + $0x38] sm:$0xff] %vm772, %v771
      %p781 = scmp.lt.s32.totalorder %s20, 1
      %s782 = scalar_select %p781, %s20, 1
      %p783 = scmp.lt.s32.totalorder %s21, 0
      %s784 = scalar_select %p783, %s21, 0
      %s785 = smul.addr %s782, 8
      %s786 = sadd.s32 %s784, %s785
      %s787 = smul.addr %s786, 8
      %s788 = scalar_lea.vmem %s5, %s787
      // Predicated region
      $region41: #{encoder_forward.1} parent=39 // pred_check
        %p789 = pneg %p160
      $region42: #{encoder_forward.1} parent=39 // pred_check_branch
        %791 = sbr.rel (%p789) target = $region44
      $region43: #{encoder_forward.1} parent=39 // pred_region
        _
      $region44: #{encoder_forward.1} parent=39 // pred_fallthru
        _
    $region40: #{encoder_forward.1} parent=5 // pred_fallthru
      _
    %p792 = scmp.le.s32.totalorder 2, %s11
    // Predicated region
    $region45: #{encoder_forward.1} parent=5 // pred_check
      %p793 = pneg %p792
    $region46: #{encoder_forward.1} parent=5 // pred_check_branch
      %795 = sbr.rel (%p793) target = $region48
    $region47: #{encoder_forward.1} parent=5 // pred_region
      %s796 = ssub.s32 %s11, 2
      // Predicated region
      $region49: #{encoder_forward.1} parent=47 // pred_check
        %p797 = pneg %p166
      $region50: #{encoder_forward.1} parent=47 // pred_check_branch
        %799 = sbr.rel (%p797) target = $region52
      $region51: #{encoder_forward.1} parent=47 // pred_region
        %p800 = scmp.lt.s32.totalorder %s22, 1
        %s801 = scalar_select %p800, %s22, 1
        %p802 = scmp.lt.s32.totalorder %s23, 0
        %s803 = scalar_select %p802, %s23, 0
        %s804 = smul.addr %s801, 8
        %s805 = sadd.s32 %s803, %s804
        %s806 = smul.addr %s805, 8
        %s807 = scalar_lea.vmem %s5, %s806
      $region52: #{encoder_forward.1} parent=47 // pred_fallthru
        _
    $region48: #{encoder_forward.1} parent=5 // pred_fallthru
      _
  $region6: #{encoder_forward.1} parent=0 // loop_footer
    %s15 = sadd.s32 1, %s11
  $region7: #{encoder_forward.1} parent=0 // loop_footer_branch
    %10 = sbr.rel target = $region3
  $region8: #{encoder_forward.1} parent=0 // loop_exit
    _

</llo_original>
